<compile_context>
chip_gen: v7x
topology: tpu7x:2x2x1
jax: 0.10.0
libtpu: 0.0.40
codegen_flags: <defaults>
</compile_context>

<pallas_src>
import functools

import jax
import jax.numpy as jnp
from jax.experimental import pallas as pl
from jax.experimental.pallas import tpu as pltpu

BN_EPS = 1e-5
LANE = 128


def _round_up(n, m):
    return pl.cdiv(n, m) * m


def _pad2(a, rows, cols):
    return jnp.pad(a, ((0, rows - a.shape[0]), (0, cols - a.shape[1])))


def _vmem_capacity_bytes():
    """Per-core VMEM capacity; conservative 64 MiB (v7x) fallback."""
    try:
        info = pltpu.get_tpu_info()
        cap = getattr(info, "vmem_capacity_bytes", None)
        if cap:
            return int(cap)
    except Exception:
        pass
    return 64 * 1024 * 1024


def classifier_kernel(x_ref, w1_ref, b1_ref, w2_ref, b2_ref, out_ref, acc_ref):
    """Grid = (batch_tiles, k_tiles).  k (Cin reduction) is the last, 'arbitrary' axis."""
    k = pl.program_id(1)

    @pl.when(k == 0)
    def _():
        acc_ref[...] = jnp.zeros_like(acc_ref)

    # layer1 Dropout(0.3) -> identity in eval mode.
    # layer2 Linear (BN already folded into w1'/b1' on the host): partial contraction over Cin.
    acc_ref[...] += jnp.dot(x_ref[...], w1_ref[...], preferred_element_type=jnp.float32)

    @pl.when(k == pl.num_programs(1) - 1)
    def _():
        # Folded bias + ReLU epilogue in f32 (free VPU slots under the MXU), then layer3 Linear.
        h = jnp.maximum(acc_ref[...] + b1_ref[...], 0.0)
        pred = jnp.dot(h.astype(w2_ref.dtype), w2_ref[...],
                       preferred_element_type=jnp.float32)
        out_ref[...] = (pred + b2_ref[...]).astype(out_ref.dtype)


@functools.partial(jax.jit, static_argnames=("use_bf16", "out_bf16", "k_tile"))
def classifier_forward(x, params, *, use_bf16=True, out_bf16=False, k_tile=None):
    """Fused classifier forward. x: (B, C_in) (or (C_in,), mirroring unsqueeze)."""
    if x.ndim < 2:                      # mirror `x = x.unsqueeze(0)`
        x = x[None, :]
    w1, b1, gamma, beta, mean, var, w2, b2 = params

    # --- host-side BN folding into Linear1 (algebraically exact, eval-mode stats) ---
    scale = gamma * jax.lax.rsqrt(var + BN_EPS)          # (1, Cmid)
    w1f = w1 * scale                                     # (Cin, Cmid), column-wise scale
    b1f = (b1 - mean) * scale + beta                     # (1, Cmid)

    B, Cin = x.shape
    Cmid = w1.shape[1]
    ncls = w2.shape[1]

    mm_dtype = jnp.bfloat16 if use_bf16 else jnp.float32
    out_dtype = jnp.bfloat16 if out_bf16 else jnp.float32
    wsize = jnp.dtype(mm_dtype).itemsize
    osize = jnp.dtype(out_dtype).itemsize
    sub = 16 if use_bf16 else 8          # bf16 vregs pack (16,128) -> 16-sublane tiles

    Cin_p = _round_up(Cin, LANE)
    Cmid_p = _round_up(Cmid, LANE)
    ncls_p = _round_up(ncls, LANE)

    # --- per-generation VMEM policy ---
    vmem_cap = _vmem_capacity_bytes()
    vmem_limit_cap = int(vmem_cap * 3 // 4)   # leave headroom for compiler-internal scratch
    budget = int(vmem_cap * 3 // 5)           # target footprint for tile selection

    # --- choose K tile (Cin reduction axis); weights counted double-buffered (conservative) ---
    w2_bytes = 2 * Cmid_p * ncls_p * wsize + 2 * (Cmid_p + ncls_p) * 4
    if k_tile is not None:
        TK = min(_round_up(k_tile, LANE), Cin_p)
    elif 2 * Cin_p * Cmid_p * wsize + w2_bytes <= budget // 2:
        TK = Cin_p                            # w1 fully resident (common case)
    else:
        avail = max(budget // 2 - w2_bytes, 2 * LANE * Cmid_p * wsize)
        TK = max(LANE, min(Cin_p, (avail // (2 * Cmid_p * wsize)) // LANE * LANE))
    Cin_pad = _round_up(Cin_p, TK)
    k_tiles = Cin_pad // TK

    # --- choose batch tile TM from the remaining VMEM budget ---
    weight_vmem = 2 * TK * Cmid_p * wsize + w2_bytes
    per_row = 2 * TK * wsize + 2 * ncls_p * osize + 2 * Cmid_p * 4  # x/out dbl-buf + acc + h
    rows_fit = max(sub, (budget - weight_vmem) // per_row)
    tm_budget = max(sub, min(1024, (rows_fit // sub) * sub))

    B_r = _round_up(B, sub)
    n_bt = pl.cdiv(B_r, tm_budget)
    if B_r >= 2 * sub:
        n_bt = max(n_bt, 2)                   # >=2 batch steps so both v7x TCs get work
    TM = _round_up(pl.cdiv(B_r, n_bt), sub)
    B_p = _round_up(B_r, TM)
    n_bt = B_p // TM

    # --- pad to lane/tile-aligned shapes (zero padding is exact; extra rows sliced off) ---
    x_p = _pad2(x, B_p, Cin_pad).astype(mm_dtype)
    w1_p = _pad2(w1f, Cin_pad, Cmid_p).astype(mm_dtype)
    b1_p = _pad2(b1f, 1, Cmid_p).astype(jnp.float32)     # biases / epilogue stay f32
    w2_p = _pad2(w2, Cmid_p, ncls_p).astype(mm_dtype)
    b2_p = _pad2(b2, 1, ncls_p).astype(jnp.float32)

    grid = (n_bt, k_tiles)

    flop_factor = 1 if use_bf16 else 3       # f32 inputs lower to multi-pass MXU matmuls
    cost = pl.CostEstimate(
        flops=flop_factor * 2 * B_p * (Cin_pad * Cmid_p + Cmid_p * ncls_p),
        transcendentals=0,
        bytes_accessed=(B_p * Cin_pad * wsize
                        + Cin_pad * Cmid_p * wsize * (n_bt if k_tiles > 1 else 1)
                        + Cmid_p * ncls_p * wsize
                        + B_p * ncls_p * osize
                        + (Cmid_p + ncls_p) * 4),
    )

    vmem_est = weight_vmem + TM * per_row
    vmem_limit = min(vmem_limit_cap, max(int(vmem_est * 3 // 2), 32 * 1024 * 1024))

    out_p = pl.pallas_call(
        classifier_kernel,
        out_shape=jax.ShapeDtypeStruct((B_p, ncls_p), out_dtype),
        grid=grid,
        in_specs=[
            pl.BlockSpec((TM, TK), lambda i, k: (i, k)),        # x: batch x Cin tiles
            pl.BlockSpec((TK, Cmid_p), lambda i, k: (k, 0)),    # w1': Cin-tiled (resident if TK==Cin)
            pl.BlockSpec((1, Cmid_p), lambda i, k: (0, 0)),     # b1': resident
            pl.BlockSpec((Cmid_p, ncls_p), lambda i, k: (0, 0)),  # w2: resident
            pl.BlockSpec((1, ncls_p), lambda i, k: (0, 0)),     # b2: resident
        ],
        out_specs=pl.BlockSpec((TM, ncls_p), lambda i, k: (i, 0)),
        scratch_shapes=[pltpu.VMEM((TM, Cmid_p), jnp.float32)],  # f32 accumulator across k
        compiler_params=pltpu.CompilerParams(
            dimension_semantics=("parallel", "arbitrary"),
            vmem_limit_bytes=vmem_limit,
        ),
        cost_estimate=cost,
    )(x_p, w1_p, b1_p, w2_p, b2_p)

    return out_p[:B, :ncls]


def init_params(key, in_channel, mid_channel, n_class):
    """Deterministic kaiming-style init (matches module shapes, not a checkpoint)."""
    k1, k2 = jax.random.split(key)
    std1 = (2.0 / in_channel) ** 0.5
    std2 = (2.0 / mid_channel) ** 0.5
    w1 = jax.random.normal(k1, (in_channel, mid_channel), jnp.float32) * std1
    b1 = jnp.zeros((1, mid_channel), jnp.float32)
    gamma = jnp.ones((1, mid_channel), jnp.float32)
    beta = jnp.zeros((1, mid_channel), jnp.float32)
    running_mean = jnp.zeros((1, mid_channel), jnp.float32)
    running_var = jnp.ones((1, mid_channel), jnp.float32)
    w2 = jax.random.normal(k2, (mid_channel, n_class), jnp.float32) * std2
    b2 = jnp.zeros((1, n_class), jnp.float32)
    return (w1, b1, gamma, beta, running_mean, running_var, w2, b2)


def reference_forward(x, params):
    """Pure-JAX reference (un-folded BN) for correctness check."""
    if x.ndim < 2:
        x = x[None, :]
    w1, b1, gamma, beta, mean, var, w2, b2 = params
    h = x @ w1 + b1
    h = (h - mean) * jax.lax.rsqrt(var + BN_EPS) * gamma + beta
    h = jnp.maximum(h, 0.0)
    return h @ w2 + b2


if __name__ == "__main__":
    key = jax.random.PRNGKey(0)
    kx, kp, kx2, kp2 = jax.random.split(key, 4)

    # --- primary small config ---
    B, in_channel, mid_channel, n_class = 8, 32, 64, 16
    x = jax.random.normal(kx, (B, in_channel), jnp.float32)
    params = init_params(kp, in_channel, mid_channel, n_class)
    ref = reference_forward(x, params)

    # default path: bf16 weights/activations on the MXU, f32 accumulation + epilogue
    out_bf16 = jax.block_until_ready(classifier_forward(x, params))
    assert out_bf16.shape == (B, n_class)
    assert jnp.allclose(out_bf16, ref, atol=1e-1, rtol=1e-1), "bf16 mismatch vs reference"

    # f32 path (tight check)
    out_f32 = jax.block_until_ready(classifier_forward(x, params, use_bf16=False))
    assert out_f32.shape == (B, n_class)
    assert jnp.allclose(out_f32, ref, atol=1e-4, rtol=1e-4), "f32 mismatch vs reference"

    # bf16 output writeback option
    out_obf = jax.block_until_ready(classifier_forward(x, params, out_bf16=True))
    assert out_obf.dtype == jnp.bfloat16
    assert jnp.allclose(out_obf.astype(jnp.float32), ref, atol=1e-1, rtol=1e-1), "bf16-out mismatch"

    # 1-D input path (mirrors x.unsqueeze(0))
    out_1d = jax.block_until_ready(classifier_forward(x[0], params, use_bf16=False))
    assert out_1d.shape == (1, n_class)
    assert jnp.allclose(out_1d, ref[0:1], atol=1e-4, rtol=1e-4), "1-D input mismatch"

    # --- K-tiled (Cin reduction axis) path, forced with k_tile=128 ---
    in_channel2 = 300                      # pads to 384 -> 3 k-steps of 128
    x2 = jax.random.normal(kx2, (B, in_channel2), jnp.float32)
    params2 = init_params(kp2, in_channel2, mid_channel, n_class)
    ref2 = reference_forward(x2, params2)
    out_kt = jax.block_until_ready(
        classifier_forward(x2, params2, use_bf16=False, k_tile=128))
    assert out_kt.shape == (B, n_class)
    assert jnp.allclose(out_kt, ref2, atol=1e-3, rtol=1e-3), "k-tiled mismatch vs reference"

    print("KERNEL_OK")
</pallas_src>

<mosaic_0001>
module attributes {stable_mosaic.version = 11 : i64} {
  func.func @classifier_kernel(%arg0: i32, %arg1: i32, %arg2: memref<16x128xbf16, #tpu.memory_space<vmem>>, %arg3: memref<128x128xbf16, #tpu.memory_space<vmem>>, %arg4: memref<1x128xf32, #tpu.memory_space<vmem>>, %arg5: memref<128x128xbf16, #tpu.memory_space<vmem>>, %arg6: memref<1x128xf32, #tpu.memory_space<vmem>>, %arg7: memref<16x128xf32, #tpu.memory_space<vmem>>, %arg8: memref<16x128xf32, #tpu.memory_space<vmem>>) attributes {dimension_semantics = [#tpu.dimension_semantics<parallel>, #tpu.dimension_semantics<arbitrary>], iteration_bounds = array<i64: 1, 1>, scalar_prefetch = 0 : i64, scratch_operands = 1 : i64, tpu.core_type = #tpu.core_type<tc>, window_params = [{transform_indices = @transform_0, window_bounds = array<i64: 16, 128>}, {transform_indices = @transform_1, window_bounds = array<i64: 128, 128>}, {pipeline_mode = #tpu.pipeline_mode<synchronous>, transform_indices = @transform_2, window_bounds = array<i64: 1, 128>}, {pipeline_mode = #tpu.pipeline_mode<synchronous>, transform_indices = @transform_3, window_bounds = array<i64: 128, 128>}, {pipeline_mode = #tpu.pipeline_mode<synchronous>, transform_indices = @transform_4, window_bounds = array<i64: 1, 128>}, {transform_indices = @transform_5, window_bounds = array<i64: 16, 128>}]} {
    %c0_i32 = arith.constant 0 : i32
    %0 = arith.cmpi eq, %arg1, %c0_i32 : i32
    %1 = arith.extui %0 : i1 to i32
    %c0_i32_0 = arith.constant 0 : i32
    %2 = arith.cmpi ne, %1, %c0_i32_0 : i32
    scf.if %2 {
      %cst_10 = arith.constant 0.000000e+00 : f32
      %12 = vector.broadcast %cst_10 : f32 to vector<16x128xf32>
      %c0_11 = arith.constant 0 : index
      %c0_12 = arith.constant 0 : index
      %13 = vector.load %arg8[%c0_11, %c0_12] : memref<16x128xf32, #tpu.memory_space<vmem>>, vector<16x128xf32>
      tpu.vector_store %arg8[%c0_11, %c0_12], %12 {strides = array<i32>} : memref<16x128xf32, #tpu.memory_space<vmem>>, vector<16x128xf32>,
    } else {
    }
    %c0 = arith.constant 0 : index
    %c0_1 = arith.constant 0 : index
    %3 = vector.load %arg8[%c0, %c0_1] : memref<16x128xf32, #tpu.memory_space<vmem>>, vector<16x128xf32>
    %c0_2 = arith.constant 0 : index
    %c0_3 = arith.constant 0 : index
    %4 = vector.load %arg2[%c0_2, %c0_3] : memref<16x128xbf16, #tpu.memory_space<vmem>>, vector<16x128xbf16>
    %c0_4 = arith.constant 0 : index
    %c0_5 = arith.constant 0 : index
    %5 = vector.load %arg3[%c0_4, %c0_5] : memref<128x128xbf16, #tpu.memory_space<vmem>>, vector<128x128xbf16>
    %cst = arith.constant dense<0.000000e+00> : vector<16x128xf32>
    %6 = tpu.matmul %4, %5, %cst {dimension_numbers = #tpu.dot_dimension_numbers<[1], [0], [0], [1], [0, 0, 1, 1], [], []>} : vector<16x128xbf16>, vector<128x128xbf16>, vector<16x128xf32> -> vector<16x128xf32>
    %7 = arith.addf %3, %6 : vector<16x128xf32>
    %c0_6 = arith.constant 0 : index
    %c0_7 = arith.constant 0 : index
    %8 = vector.load %arg8[%c0_6, %c0_7] : memref<16x128xf32, #tpu.memory_space<vmem>>, vector<16x128xf32>
    tpu.vector_store %arg8[%c0_6, %c0_7], %7 {strides = array<i32>} : memref<16x128xf32, #tpu.memory_space<vmem>>, vector<16x128xf32>,
    %c0_i32_8 = arith.constant 0 : i32
    %9 = arith.cmpi eq, %arg1, %c0_i32_8 : i32
    %10 = arith.extui %9 : i1 to i32
    %c0_i32_9 = arith.constant 0 : i32
    %11 = arith.cmpi ne, %10, %c0_i32_9 : i32
    scf.if %11 {
      %c0_10 = arith.constant 0 : index
      %c0_11 = arith.constant 0 : index
      %12 = vector.load %arg8[%c0_10, %c0_11] : memref<16x128xf32, #tpu.memory_space<vmem>>, vector<16x128xf32>
      %c0_12 = arith.constant 0 : index
      %c0_13 = arith.constant 0 : index
      %13 = vector.load %arg4[%c0_12, %c0_13] : memref<1x128xf32, #tpu.memory_space<vmem>>, vector<1x128xf32>
      %14 = vector.broadcast %13 : vector<1x128xf32> to vector<16x128xf32>
      %15 = arith.addf %12, %14 : vector<16x128xf32>
      %cst_14 = arith.constant 0.000000e+00 : f32
      %16 = vector.broadcast %cst_14 : f32 to vector<16x128xf32>
      %17 = arith.maximumf %15, %16 : vector<16x128xf32>
      %18 = arith.truncf %17 : vector<16x128xf32> to vector<16x128xbf16>
      %c0_15 = arith.constant 0 : index
      %c0_16 = arith.constant 0 : index
      %19 = vector.load %arg5[%c0_15, %c0_16] : memref<128x128xbf16, #tpu.memory_space<vmem>>, vector<128x128xbf16>
      %cst_17 = arith.constant dense<0.000000e+00> : vector<16x128xf32>
      %20 = tpu.matmul %18, %19, %cst_17 {dimension_numbers = #tpu.dot_dimension_numbers<[1], [0], [0], [1], [0, 0, 1, 1], [], []>} : vector<16x128xbf16>, vector<128x128xbf16>, vector<16x128xf32> -> vector<16x128xf32>
      %c0_18 = arith.constant 0 : index
      %c0_19 = arith.constant 0 : index
      %21 = vector.load %arg6[%c0_18, %c0_19] : memref<1x128xf32, #tpu.memory_space<vmem>>, vector<1x128xf32>
      %22 = vector.broadcast %21 : vector<1x128xf32> to vector<16x128xf32>
      %23 = arith.addf %20, %22 : vector<16x128xf32>
      %c0_20 = arith.constant 0 : index
      %c0_21 = arith.constant 0 : index
      %24 = vector.load %arg7[%c0_20, %c0_21] : memref<16x128xf32, #tpu.memory_space<vmem>>, vector<16x128xf32>
      tpu.vector_store %arg7[%c0_20, %c0_21], %23 {strides = array<i32>} : memref<16x128xf32, #tpu.memory_space<vmem>>, vector<16x128xf32>,
    } else {
    }
    return
  }
  func.func @transform_0(%arg0: i32, %arg1: i32) -> (i32, i32) {
    %c0_i32 = arith.constant 0 : i32
    return %arg0, %arg1 : i32, i32
  }
  func.func @transform_1(%arg0: i32, %arg1: i32) -> (i32, i32) {
    %c0_i32 = arith.constant 0 : i32
    %c0_i32_0 = arith.constant 0 : i32
    return %arg1, %c0_i32 : i32, i32
  }
  func.func @transform_2(%arg0: i32, %arg1: i32) -> (i32, i32) {
    %c0_i32 = arith.constant 0 : i32
    %c0_i32_0 = arith.constant 0 : i32
    %c0_i32_1 = arith.constant 0 : i32
    return %c0_i32, %c0_i32_0 : i32, i32
  }
  func.func @transform_3(%arg0: i32, %arg1: i32) -> (i32, i32) {
    %c0_i32 = arith.constant 0 : i32
    %c0_i32_0 = arith.constant 0 : i32
    %c0_i32_1 = arith.constant 0 : i32
    return %c0_i32, %c0_i32_0 : i32, i32
  }
  func.func @transform_4(%arg0: i32, %arg1: i32) -> (i32, i32) {
    %c0_i32 = arith.constant 0 : i32
    %c0_i32_0 = arith.constant 0 : i32
    %c0_i32_1 = arith.constant 0 : i32
    return %c0_i32, %c0_i32_0 : i32, i32
  }
  func.func @transform_5(%arg0: i32, %arg1: i32) -> (i32, i32) {
    %c0_i32 = arith.constant 0 : i32
    %c0_i32_0 = arith.constant 0 : i32
    return %arg0, %c0_i32 : i32, i32
  }
}

</mosaic_0001>

<llo_original>
// kernel: classifier_forward.1
$region0: #{classifier_forward.1}
  #allocation0 [shape = 'u32[]', space=smem, size = 0x4, offset = 0x4, fixed_abs, tag = 'smem constant byte address 0x4 - core index']
  #allocation1 [shape = 'u32[144,128]{1,0:T(1,128)}', space=vmem, size = 0x12000, scoped, tag = 'internal scratch']
  #allocation2 [shape = 'f32[16,128]{1,0:T(8,128)}', space=vmem, size = 0x2000, scoped, tag = 'scratch operand']
  %s0 = inlined_call_operand.vmem [shape: bf16[16,128], index: 0, kind: input, shape index: {}]
  %s1 = inlined_call_operand.vmem [shape: bf16[128,128], index: 1, kind: input, shape index: {}]
  %s2 = inlined_call_operand.vmem [shape: f32[1,128], index: 2, kind: input, shape index: {}]
  %s3 = inlined_call_operand.vmem [shape: bf16[128,128], index: 3, kind: input, shape index: {}]
  %s4 = inlined_call_operand.vmem [shape: f32[1,128], index: 4, kind: input, shape index: {}]
  %s5 = inlined_call_operand.vmem [shape: f32[16,128], index: 5, kind: output, shape index: {}]
  %s6 = sld [smem:[#allocation0]]
  $region38: #{classifier_forward.1} parent=0
    _
  %s8 = ssub.s32 1, %s6
  %s9 = scalar_select 0, %s8, %s6
  // Predicated region
  $region2: #{classifier_forward.1} parent=0 // pred_check
    _
  $region3: #{classifier_forward.1} parent=0 // pred_check_branch
    %11 = sbr.rel (0) target = $region5
  $region4: #{classifier_forward.1} parent=0 // pred_region
    _
  $region5: #{classifier_forward.1} parent=0 // pred_fallthru
    _
  // Predicated region
  $region6: #{classifier_forward.1} parent=0 // pred_check
    _
  $region7: #{classifier_forward.1} parent=0 // pred_check_branch
    %13 = sbr.rel (0) target = $region9
  $region8: #{classifier_forward.1} parent=0 // pred_region
    _
  $region9: #{classifier_forward.1} parent=0 // pred_fallthru
    _
  // Predicated region
  $region10: #{classifier_forward.1} parent=0 // pred_check
    _
  $region11: #{classifier_forward.1} parent=0 // pred_check_branch
    %15 = sbr.rel (0) target = $region13
  $region12: #{classifier_forward.1} parent=0 // pred_region
    _
  $region13: #{classifier_forward.1} parent=0 // pred_fallthru
    _
  // Predicated region
  $region14: #{classifier_forward.1} parent=0 // pred_check
    _
  $region15: #{classifier_forward.1} parent=0 // pred_check_branch
    %17 = sbr.rel (0) target = $region17
  $region16: #{classifier_forward.1} parent=0 // pred_region
    _
  $region17: #{classifier_forward.1} parent=0 // pred_fallthru
    _
  // Predicated region
  $region18: #{classifier_forward.1} parent=0 // pred_check
    _
  $region19: #{classifier_forward.1} parent=0 // pred_check_branch
    %19 = sbr.rel (0) target = $region21
  $region20: #{classifier_forward.1} parent=0 // pred_region
    _
  $region21: #{classifier_forward.1} parent=0 // pred_fallthru
    _
  %p21 = scmp.eq.s32.totalorder 0, 0
  // Predicated region
  $region22: #{classifier_forward.1} parent=0 // pred_check
    %p22 = pneg %p21
  $region23: #{classifier_forward.1} parent=0 // pred_check_branch
    %24 = sbr.rel (%p22) target = $region25
  $region24: #{classifier_forward.1} parent=0 // pred_region
    %25 = vst [vmem:[#allocation2] sm:$0xff] 0.0
    %26 = vst [vmem:[#allocation2 + $0x8] sm:$0xff] 0.0
  $region25: #{classifier_forward.1} parent=0 // pred_fallthru
    _
  %v27 = vld [vmem:[#allocation2] sm:$0xff]
  %v28 = vld [vmem:[#allocation2 + $0x8] sm:$0xff]
  %v29 = vld [vmem:[%s0] sm:$0xf]
  %v30 = vld [vmem:[%s0 + $0x4] sm:$0xf]
  %v31 = vld [vmem:[%s1] sm:$0xf]
  %v32 = vld [vmem:[%s1 + $0x4] sm:$0xf]
  %v33 = vld [vmem:[%s1 + $0x8] sm:$0xf]
  %v34 = vld [vmem:[%s1 + $0xc] sm:$0xf]
  %v35 = vld [vmem:[%s1 + $0x10] sm:$0xf]
  %v36 = vld [vmem:[%s1 + $0x14] sm:$0xf]
  %v37 = vld [vmem:[%s1 + $0x18] sm:$0xf]
  %v38 = vld [vmem:[%s1 + $0x1c] sm:$0xf]
  %v39 = vld [vmem:[%s1 + $0x20] sm:$0xf]
  %v40 = vld [vmem:[%s1 + $0x24] sm:$0xf]
  %v41 = vld [vmem:[%s1 + $0x28] sm:$0xf]
  %v42 = vld [vmem:[%s1 + $0x2c] sm:$0xf]
  %v43 = vld [vmem:[%s1 + $0x30] sm:$0xf]
  %v44 = vld [vmem:[%s1 + $0x34] sm:$0xf]
  %v45 = vld [vmem:[%s1 + $0x38] sm:$0xf]
  %v46 = vld [vmem:[%s1 + $0x3c] sm:$0xf]
  %v49 = vunpack.c.l.b16 %v29
  %v50 = vunpack.c.l.b16 %v30
  %v51 = vpack.c.b16 %v50, %v49
  %v69 = vunpack.c.l.b16 %v31
  %v70 = vunpack.c.l.b16 %v32
  %v71 = vunpack.c.l.b16 %v33
  %v72 = vunpack.c.l.b16 %v34
  %v73 = vunpack.c.l.b16 %v35
  %v74 = vunpack.c.l.b16 %v36
  %v75 = vunpack.c.l.b16 %v37
  %v76 = vunpack.c.l.b16 %v38
  %v77 = vunpack.c.l.b16 %v39
  %v78 = vunpack.c.l.b16 %v40
  %v79 = vunpack.c.l.b16 %v41
  %v80 = vunpack.c.l.b16 %v42
  %v81 = vunpack.c.l.b16 %v43
  %v82 = vunpack.c.l.b16 %v44
  %v83 = vunpack.c.l.b16 %v45
  %v84 = vunpack.c.l.b16 %v46
  %v85 = vpack.c.b16 %v70, %v69
  %v86 = vpack.c.b16 %v72, %v71
  %v87 = vpack.c.b16 %v74, %v73
  %v88 = vpack.c.b16 %v76, %v75
  %v89 = vpack.c.b16 %v78, %v77
  %v90 = vpack.c.b16 %v80, %v79
  %v91 = vpack.c.b16 %v82, %v81
  %v92 = vpack.c.b16 %v84, %v83
  %101 = vmatprep.subr.bf16.mxu0 0
  %102 = vmatpush1.bf16.msra.mxu0 %v85
  %103 = vmatprep.subr.bf16.mxu0 0
  %104 = vmatpush1.bf16.msra.mxu0 %v86
  %105 = vmatprep.subr.bf16.mxu0 0
  %106 = vmatpush1.bf16.msra.mxu0 %v87
  %107 = vmatprep.subr.bf16.mxu0 0
  %108 = vmatpush1.bf16.msra.mxu0 %v88
  %109 = vmatprep.subr.bf16.mxu0 0
  %110 = vmatpush1.bf16.msra.mxu0 %v89
  %111 = vmatprep.subr.bf16.mxu0 0
  %112 = vmatpush1.bf16.msra.mxu0 %v90
  %113 = vmatprep.subr.bf16.mxu0 0
  %114 = vmatpush1.bf16.msra.mxu0 %v91
  %115 = vmatprep.subr.bf16.mxu0 0
  %116 = vmatpush1.bf16.msra.mxu0 %v92
  %117 = vmatprep.subr.bf16.mxu0 0
  %118 = vmatpush1.bf16.msra.mxu0 0
  %119 = vmatprep.subr.bf16.mxu0 0
  %120 = vmatpush1.bf16.msra.mxu0 0
  %121 = vmatprep.subr.bf16.mxu0 0
  %122 = vmatpush1.bf16.msra.mxu0 0
  %123 = vmatprep.subr.bf16.mxu0 0
  %124 = vmatpush1.bf16.msra.mxu0 0
  %125 = vmatprep.subr.bf16.mxu0 0
  %126 = vmatpush1.bf16.msra.mxu0 0
  %127 = vmatprep.subr.bf16.mxu0 0
  %128 = vmatpush1.bf16.msra.mxu0 0
  %129 = vmatprep.subr.bf16.mxu0 0
  %130 = vmatpush1.bf16.msra.mxu0 0
  %131 = vmatprep.subr.bf16.mxu0 0
  %132 = vmatpush1.bf16.msra.mxu0 0
  %133 = vmatprep.mubr.bf16.mxu0 0
  %134 = vmatmul.mubr.bf16.gmra.mrb[0].mxu0 %v51
  %v135 = vpop.f32.mrb[0].mxu0
  %v136 = vadd.f32 0.0, %v135
  %v137 = vpop.f32.mrb[0].mxu0
  %v138 = vpop.f32.mrb[0].mxu0
  %v139 = vadd.f32 0.0, %v138
  %v140 = vpop.f32.mrb[0].mxu0
  %141 = vdwg.mxu0
  %v142 = vadd.f32 %v27, %v136
  %v143 = vadd.f32 %v28, %v139
  %144 = vst [vmem:[#allocation2] sm:$0xff] %v142
  %145 = vst [vmem:[#allocation2 + $0x8] sm:$0xff] %v143
  // Predicated region
  $region26: #{classifier_forward.1} parent=0 // pred_check
    %p146 = pneg %p21
  $region27: #{classifier_forward.1} parent=0 // pred_check_branch
    %148 = sbr.rel (%p146) target = $region29
  $region28: #{classifier_forward.1} parent=0 // pred_region
    %v149 = vld [vmem:[#allocation2] sm:$0xff]
    %v150 = vld [vmem:[#allocation2 + $0x8] sm:$0xff]
    %v151 = vld [vmem:[%s2] sm:$0x1]
    %v153 = vlaneseq
    %v154 = vshrl.u32 %v153, 7
    %v155 = vsub.s32 0, %v154
    %v156 = vrot.slane %v151, %v155
    %v158 = vadd.f32 %v149, %v156
    %v159 = vadd.f32 %v150, %v156
    %v160 = vmax.f32 %v158, 0.0
    %v161 = vmax.f32 %v159, 0.0
    %v162 = vpack.c.bf16 %v161, %v160
    %v163 = vld [vmem:[%s3] sm:$0xf]
    %v164 = vld [vmem:[%s3 + $0x4] sm:$0xf]
    %v165 = vld [vmem:[%s3 + $0x8] sm:$0xf]
    %v166 = vld [vmem:[%s3 + $0xc] sm:$0xf]
    %v167 = vld [vmem:[%s3 + $0x10] sm:$0xf]
    %v168 = vld [vmem:[%s3 + $0x14] sm:$0xf]
    %v169 = vld [vmem:[%s3 + $0x18] sm:$0xf]
    %v170 = vld [vmem:[%s3 + $0x1c] sm:$0xf]
    %v171 = vld [vmem:[%s3 + $0x20] sm:$0xf]
    %v172 = vld [vmem:[%s3 + $0x24] sm:$0xf]
    %v173 = vld [vmem:[%s3 + $0x28] sm:$0xf]
    %v174 = vld [vmem:[%s3 + $0x2c] sm:$0xf]
    %v175 = vld [vmem:[%s3 + $0x30] sm:$0xf]
    %v176 = vld [vmem:[%s3 + $0x34] sm:$0xf]
    %v177 = vld [vmem:[%s3 + $0x38] sm:$0xf]
    %v178 = vld [vmem:[%s3 + $0x3c] sm:$0xf]
    %v179 = vld [vmem:[%s4] sm:$0x1]
    %v181 = vlaneseq
    %v182 = vshrl.u32 %v181, 7
    %v183 = vsub.s32 0, %v182
    %v184 = vrot.slane %v179, %v183
    %v202 = vunpack.c.l.b16 %v163
    %v203 = vunpack.c.l.b16 %v164
    %v204 = vunpack.c.l.b16 %v165
    %v205 = vunpack.c.l.b16 %v166
    %v206 = vunpack.c.l.b16 %v167
    %v207 = vunpack.c.l.b16 %v168
    %v208 = vunpack.c.l.b16 %v169
    %v209 = vunpack.c.l.b16 %v170
    %v210 = vunpack.c.l.b16 %v171
    %v211 = vunpack.c.l.b16 %v172
    %v212 = vunpack.c.l.b16 %v173
    %v213 = vunpack.c.l.b16 %v174
    %v214 = vunpack.c.l.b16 %v175
    %v215 = vunpack.c.l.b16 %v176
    %v216 = vunpack.c.l.b16 %v177
    %v217 = vunpack.c.l.b16 %v178
    %v218 = vpack.c.b16 %v203, %v202
    %v219 = vpack.c.b16 %v205, %v204
    %v220 = vpack.c.b16 %v207, %v206
    %v221 = vpack.c.b16 %v209, %v208
    %v222 = vpack.c.b16 %v211, %v210
    %v223 = vpack.c.b16 %v213, %v212
    %v224 = vpack.c.b16 %v215, %v214
    %v225 = vpack.c.b16 %v217, %v216
    %234 = vmatprep.subr.bf16.mxu0 0
    %235 = vmatpush1.bf16.msra.mxu0 %v218
    %236 = vmatprep.subr.bf16.mxu0 0
    %237 = vmatpush1.bf16.msra.mxu0 %v219
    %238 = vmatprep.subr.bf16.mxu0 0
    %239 = vmatpush1.bf16.msra.mxu0 %v220
    %240 = vmatprep.subr.bf16.mxu0 0
    %241 = vmatpush1.bf16.msra.mxu0 %v221
    %242 = vmatprep.subr.bf16.mxu0 0
    %243 = vmatpush1.bf16.msra.mxu0 %v222
    %244 = vmatprep.subr.bf16.mxu0 0
    %245 = vmatpush1.bf16.msra.mxu0 %v223
    %246 = vmatprep.subr.bf16.mxu0 0
    %247 = vmatpush1.bf16.msra.mxu0 %v224
    %248 = vmatprep.subr.bf16.mxu0 0
    %249 = vmatpush1.bf16.msra.mxu0 %v225
    %250 = vmatprep.subr.bf16.mxu0 0
    %251 = vmatpush1.bf16.msra.mxu0 0
    %252 = vmatprep.subr.bf16.mxu0 0
    %253 = vmatpush1.bf16.msra.mxu0 0
    %254 = vmatprep.subr.bf16.mxu0 0
    %255 = vmatpush1.bf16.msra.mxu0 0
    %256 = vmatprep.subr.bf16.mxu0 0
    %257 = vmatpush1.bf16.msra.mxu0 0
    %258 = vmatprep.subr.bf16.mxu0 0
    %259 = vmatpush1.bf16.msra.mxu0 0
    %260 = vmatprep.subr.bf16.mxu0 0
    %261 = vmatpush1.bf16.msra.mxu0 0
    %262 = vmatprep.subr.bf16.mxu0 0
    %263 = vmatpush1.bf16.msra.mxu0 0
    %264 = vmatprep.subr.bf16.mxu0 0
    %265 = vmatpush1.bf16.msra.mxu0 0
    %266 = vmatprep.mubr.bf16.mxu0 0
    %267 = vmatmul.mubr.bf16.gmra.mrb[0].mxu0 %v162
    %v268 = vpop.f32.mrb[0].mxu0
    %v269 = vadd.f32 %v184, %v268
    %v270 = vpop.f32.mrb[0].mxu0
    %v271 = vpop.f32.mrb[0].mxu0
    %v272 = vadd.f32 %v184, %v271
    %v273 = vpop.f32.mrb[0].mxu0
    %274 = vdwg.mxu0
    %275 = vst [vmem:[%s5] sm:$0xff] %v269
    %276 = vst [vmem:[%s5 + $0x8] sm:$0xff] %v272
  $region29: #{classifier_forward.1} parent=0 // pred_fallthru
    _
  // Predicated region
  $region30: #{classifier_forward.1} parent=0 // pred_check
    _
  $region31: #{classifier_forward.1} parent=0 // pred_check_branch
    %278 = sbr.rel (0) target = $region33
  $region32: #{classifier_forward.1} parent=0 // pred_region
    _
  $region33: #{classifier_forward.1} parent=0 // pred_fallthru
    _
  // Predicated region
  $region34: #{classifier_forward.1} parent=0 // pred_check
    _
  $region35: #{classifier_forward.1} parent=0 // pred_check_branch
    %280 = sbr.rel (0) target = $region37
  $region36: #{classifier_forward.1} parent=0 // pred_region
    _
  $region37: #{classifier_forward.1} parent=0 // pred_fallthru
    _

</llo_original>
